<compile_context>
chip_gen: v5e
topology: v5e:2x2
jax: 0.10.0
libtpu: 0.0.40
codegen_flags: <defaults>
</compile_context>

<pallas_src>
import functools
from typing import NamedTuple, Optional

import jax
import jax.numpy as jnp
from jax.experimental import pallas as pl
from jax.experimental.pallas import tpu as pltpu


# ----------------------------------------------------------------------------
# Generation-aware VMEM budget
# ----------------------------------------------------------------------------
def _vmem_budget():
    """Returns (tile_budget_bytes, vmem_limit_bytes) from the chip's VMEM size."""
    try:
        cap = int(pltpu.get_tpu_info().vmem_capacity_bytes)
    except Exception:
        cap = 64 * 1024 * 1024          # conservative floor (v7x per-TC VMEM)
    budget = (cap * 5) // 8             # 80 MiB on v5e/v6e, 40 MiB on v7x
    limit = min(cap - 8 * 1024 * 1024, budget + 16 * 1024 * 1024)
    return budget, limit                # 96 MiB limit on v5e/v6e, 56 MiB on v7x


def _pick_batch_tile(B):
    """Row block for large decode batches; whole batch resident otherwise."""
    for tb in (256, 128):
        if B > tb and B % tb == 0:
            return tb
    return B


def _pick_vocab_tile(V, H, tb, emb_itemsize, budget_bytes):
    """Largest vocab tile that fits the VMEM budget.

    Prefers tiles that divide V exactly (no padding); otherwise allows padding.
    Keeps the vocab grid >= 2 tiles so v7x's two TensorCores both get work.
    """
    candidates = (4096, 3072, 2048, 1536, 1024, 768, 512, 384, 256, 128)

    def fits(cand):
        need = 2 * cand * H * emb_itemsize       # double-buffered embedding tiles
        need += 2 * tb * cand * 4                # double-buffered fp32 output tiles
        need += 2 * cand * 4                     # bias tiles
        need += tb * H * emb_itemsize + tb * 4   # resident hidden + temperatures
        return need <= budget_bytes

    # Pass 1: exact divisors of V (no padding), >= 2 tiles.
    for cand in candidates:
        if V % cand == 0 and V // cand >= 2 and fits(cand):
            return cand
    # Pass 2: allow padding, still >= 2 tiles when the vocab is big enough.
    for cand in candidates:
        if pl.cdiv(V, cand) < 2 and V > 128:
            continue
        if fits(cand):
            return cand
    return 128


# ----------------------------------------------------------------------------
# One-time weight preparation (do this at load time, not per call!)
# ----------------------------------------------------------------------------
class PreparedEmbedding(NamedTuple):
    table: jax.Array                 # (padded_V, H) in matmul dtype (bf16)
    bias: Optional[jax.Array]        # (1, padded_V) f32, or None
    vocab_size: int                  # true V (before padding)
    vocab_tile: int                  # tv used for padding / kernel tiling


def prepare_embedding(embedding, embedding_bias=None, *,
                      matmul_dtype=jnp.bfloat16, vocab_tile=None, batch_hint=8):
    """Cast the table to the matmul dtype and pad the vocab to a tile multiple.

    Call ONCE at weight-load time; re-casting per sampler call triples the HBM
    traffic of an otherwise bandwidth-bound kernel.
    """
    V, H = embedding.shape
    itemsize = jnp.dtype(matmul_dtype).itemsize
    budget, _ = _vmem_budget()
    tb = _pick_batch_tile(int(batch_hint))
    if vocab_tile is None:
        vocab_tile = _pick_vocab_tile(V, H, tb, itemsize, budget)
    padded_V = pl.cdiv(V, vocab_tile) * vocab_tile

    table = embedding.astype(matmul_dtype)
    if padded_V != V:
        table = jnp.pad(table, ((0, padded_V - V), (0, 0)))   # zero rows -> logit 0

    bias2d = None
    if embedding_bias is not None:
        bias2d = embedding_bias.astype(jnp.float32).reshape(1, V)
        if padded_V != V:
            bias2d = jnp.pad(bias2d, ((0, 0), (0, padded_V - V)))

    return PreparedEmbedding(table, bias2d, V, vocab_tile)


# ----------------------------------------------------------------------------
# Pallas kernel: logits tile = hs @ emb_tile.T (+ bias) -> softcap -> (* 1/temp)
# ----------------------------------------------------------------------------
def _logits_kernel(*refs, softcap, has_bias, has_temp):
    idx = 0
    hs_ref = refs[idx]; idx += 1          # (tb, H)  bf16 (resident per batch block)
    emb_ref = refs[idx]; idx += 1         # (tv, H)  bf16 (one streamed vocab tile)
    bias_ref = None
    temp_ref = None
    if has_bias:
        bias_ref = refs[idx]; idx += 1    # (1, tv)  f32
    if has_temp:
        temp_ref = refs[idx]; idx += 1    # (tb, 1)  f32
    out_ref = refs[idx]                   # (tb, tv) f32

    # Contract the hidden dim of both operands (== hs @ emb.T); bf16 MXU path
    # with fp32 accumulation.  (tv, H) tiles are contiguous HBM slabs -- do not
    # pre-transpose the table.
    logits = jax.lax.dot_general(
        hs_ref[...], emb_ref[...], (((1,), (1,)), ((), ())),
        preferred_element_type=jnp.float32)                 # (tb, tv) f32

    if has_bias:
        logits = logits + bias_ref[...]
    if softcap is not None:
        inv_softcap = 1.0 / float(softcap)                  # VPU mul, not divide
        logits = jnp.tanh(logits * inv_softcap) * float(softcap)
    if has_temp:
        # tb reciprocals (exact) + tb*tv VPU multiplies instead of tb*tv EUP
        # divides -- the EUP slot is already busy with the tanh softcap.
        inv_t = pl.reciprocal(temp_ref[...], approx=False)
        logits = logits * inv_t
    out_ref[...] = logits


def compute_logits(hidden_2d, prepared: PreparedEmbedding, softcap=None,
                   temperatures=None):
    """hidden_2d: (B, H); prepared: PreparedEmbedding; temps: (B,) or None.

    Returns (B, padded_V) f32 logits (caller slices to the true vocab size).
    """
    B, H = hidden_2d.shape
    table = prepared.table
    padded_V, H2 = table.shape
    assert H == H2
    tv = prepared.vocab_tile
    assert padded_V % tv == 0
    tb = _pick_batch_tile(B)
    num_v = padded_V // tv
    num_b = B // tb

    has_bias = prepared.bias is not None
    has_temp = temperatures is not None

    budget, vmem_limit = _vmem_budget()
    itemsize = jnp.dtype(table.dtype).itemsize

    # hidden cast is tiny (B*H); the big table cast happened at prepare time.
    args = [hidden_2d.astype(table.dtype), table]

    # When tiles are forced small (v7x-style 64 MiB VMEM at large H), a third
    # embedding buffer keeps the DMA engine ahead of the short per-step DMAs.
    emb_spec_kwargs = {}
    if tv <= 512 and num_v >= 4:
        need3 = (3 * tv * H * itemsize + 2 * tb * tv * 4 + 2 * tv * 4
                 + tb * H * itemsize + tb * 4)
        if need3 <= budget:
            emb_spec_kwargs["pipeline_mode"] = pl.Buffered(3)

    # Grid: vocab outer, batch inner -> the table is streamed exactly once even
    # when the batch is blocked; the small hidden block is what gets re-fetched.
    in_specs = [
        pl.BlockSpec((tb, H), lambda v, b: (b, 0)),                     # hidden
        pl.BlockSpec((tv, H), lambda v, b: (v, 0), **emb_spec_kwargs),  # table tile
    ]
    if has_bias:
        args.append(prepared.bias)
        in_specs.append(pl.BlockSpec((1, tv), lambda v, b: (0, v)))
    if has_temp:
        args.append(temperatures.reshape(B, 1).astype(jnp.float32))
        in_specs.append(pl.BlockSpec((tb, 1), lambda v, b: (b, 0)))

    kernel = functools.partial(_logits_kernel, softcap=softcap,
                               has_bias=has_bias, has_temp=has_temp)

    return pl.pallas_call(
        kernel,
        out_shape=jax.ShapeDtypeStruct((B, padded_V), jnp.float32),
        grid_spec=pltpu.PrefetchScalarGridSpec(
            num_scalar_prefetch=0,
            grid=(num_v, num_b),
            in_specs=in_specs,
            out_specs=pl.BlockSpec((tb, tv), lambda v, b: (b, v)),
        ),
        compiler_params=pltpu.CompilerParams(
            # All tiles independent -> shard across TCs (v7x megacore).
            dimension_semantics=("parallel", "parallel"),
            vmem_limit_bytes=vmem_limit),
    )(*args)


# ----------------------------------------------------------------------------
# top-p / top-k filtering bounded by lax.top_k (no full-vocab double argsort)
# ----------------------------------------------------------------------------
def _topk_filtered_probs(probs, top_ps, top_ks, k_bound):
    """Returns (filtered probs over the top-k_bound prefix, their vocab indices).

    Identical to the full-sort torch reference as long as top_ks[i] <= k_bound
    and the top-p mass lives inside the prefix.
    """
    topv, topi = jax.lax.top_k(probs, k_bound)                     # descending
    csum = jnp.cumsum(topv, axis=-1)
    topv = jnp.where((csum - topv) > top_ps[:, None], 0.0, topv)   # top-p
    ranks = jnp.arange(k_bound, dtype=jnp.int32)[None, :]
    topv = jnp.where(ranks >= top_ks[:, None], 0.0, topv)          # top-k
    denom = jnp.maximum(topv.sum(axis=-1, keepdims=True),
                        jnp.finfo(topv.dtype).tiny)                # /0 guard
    return topv / denom, topi


# ----------------------------------------------------------------------------
# Full Sampler.forward equivalent
# ----------------------------------------------------------------------------
def sampler_forward(embedding,
                    hidden_states,
                    output_positions,
                    temperatures,
                    top_ps,
                    top_ks,
                    embedding_bias=None,
                    final_logit_softcapping=None,
                    sample_key=None,
                    top_k_bound=None,
                    matmul_dtype=jnp.bfloat16):
    # Prefer passing a PreparedEmbedding (built once at weight-load time).
    if isinstance(embedding, PreparedEmbedding):
        assert embedding_bias is None, "bias is folded into PreparedEmbedding"
        prepared = embedding
    else:
        # NOTE: this path re-casts/pads the whole V*H table every call; use
        # prepare_embedding() once at load time for production.
        prepared = prepare_embedding(embedding, embedding_bias,
                                     matmul_dtype=matmul_dtype,
                                     batch_hint=hidden_states.shape[0])

    # hidden_states.index_select(1, output_positions).squeeze(dim=1)
    assert output_positions.shape[0] == 1, (
        "Sampler.forward (like the torch module) assumes a single output position")
    hs = jnp.take(hidden_states, output_positions, axis=1)[:, 0, :]   # (B, H)

    logits_full = compute_logits(hs, prepared, final_logit_softcapping,
                                 temperatures)
    logits = logits_full[:, :prepared.vocab_size]       # drop padded vocab cols

    if temperatures is None:
        return jnp.argmax(logits, axis=-1), logits

    # `logits` already includes the temperature scaling (fused in the kernel),
    # matching torch's in-place logits.div_(temperatures.unsqueeze(1)).
    probs = jax.nn.softmax(logits, axis=-1)

    V = probs.shape[-1]
    k_bound = V if top_k_bound is None else min(int(top_k_bound), V)
    if top_k_bound is not None:
        try:
            assert int(jnp.max(top_ks)) <= k_bound, \
                "top_k_bound must cover max(top_ks) for exact torch semantics"
        except Exception:
            pass   # traced top_ks: skip the concrete check
    # TODO(synk): exact equivalence to the torch full-sort path also requires
    # the top-p mass to lie within the k_bound prefix; pass top_k_bound=None
    # for the exact (full-vocab) path.
    topv, topi = _topk_filtered_probs(probs, top_ps, top_ks, k_bound)

    # torch.multinomial(probs, 1, replacement=True) -> categorical draw in the
    # reduced top-k space, then map back to vocab ids.
    # TODO(synk): PyTorch's multinomial RNG stream cannot be reproduced exactly;
    # semantics (one categorical sample per row) are identical.
    log_p = jnp.where(topv > 0, jnp.log(topv), -jnp.inf)
    choice = jax.random.categorical(sample_key, log_p, axis=-1)
    next_token_ids = jnp.take_along_axis(topi, choice[:, None], axis=-1)[:, 0]
    return next_token_ids, logits


# ----------------------------------------------------------------------------
# Demo / self-test
# ----------------------------------------------------------------------------
if __name__ == "__main__":
    B, S, H, V = 2, 8, 128, 256
    FINAL_LOGIT_SOFTCAP = 30.0  # Gemma-2 style config.final_logit_softcapping
    TOP_K_BOUND = 64

    key = jax.random.PRNGKey(0)
    k_emb, k_hid, k_bias, k_sample = jax.random.split(key, 4)

    embedding = jax.random.normal(k_emb, (V, H), dtype=jnp.float32) * 0.05
    hidden_states = jax.random.normal(k_hid, (B, S, H), dtype=jnp.float32)
    embedding_bias = jax.random.normal(k_bias, (V,), dtype=jnp.float32) * 0.01
    output_positions = jnp.array([S - 1], dtype=jnp.int32)   # last position
    temperatures = jnp.array([0.7, 1.0], dtype=jnp.float32)
    top_ps = jnp.array([0.9, 0.95], dtype=jnp.float32)
    top_ks = jnp.array([50, 10], dtype=jnp.int32)

    # One-time weight prep (bf16 cast + vocab padding), hoisted out of the call.
    prepared = prepare_embedding(embedding, embedding_bias,
                                 matmul_dtype=jnp.bfloat16, batch_hint=B)
    jax.block_until_ready(prepared.table)

    # Sampling path (temperatures provided).
    next_ids, logits_s = sampler_forward(
        prepared, hidden_states, output_positions,
        temperatures, top_ps, top_ks,
        final_logit_softcapping=FINAL_LOGIT_SOFTCAP,
        sample_key=k_sample,
        top_k_bound=TOP_K_BOUND)
    jax.block_until_ready((next_ids, logits_s))

    # Greedy path (temperatures is None).
    argmax_ids, logits_g = sampler_forward(
        prepared, hidden_states, output_positions,
        None, top_ps, top_ks,
        final_logit_softcapping=FINAL_LOGIT_SOFTCAP)
    jax.block_until_ready((argmax_ids, logits_g))

    # --- Reference (pure JAX) using the same bf16 operands / fp32 accumulation.
    hs_ref = hidden_states[:, output_positions[0], :].astype(jnp.bfloat16)
    emb_ref = embedding.astype(jnp.bfloat16)
    ref_logits = jax.lax.dot_general(
        hs_ref, emb_ref, (((1,), (1,)), ((), ())),
        preferred_element_type=jnp.float32)
    ref_logits = ref_logits + embedding_bias[None, :]
    ref_logits = jnp.tanh(ref_logits / FINAL_LOGIT_SOFTCAP) * FINAL_LOGIT_SOFTCAP

    assert logits_g.shape == (B, V) and next_ids.shape == (B,)
    assert jnp.allclose(logits_g, ref_logits, atol=2e-3, rtol=2e-3)
    assert jnp.array_equal(argmax_ids, jnp.argmax(ref_logits, axis=-1))

    # Sampling-path logits include the fused temperature scaling.
    ref_scaled = ref_logits / temperatures[:, None]
    assert jnp.allclose(logits_s, ref_scaled, atol=2e-3, rtol=2e-3)

    # top_k-bounded filtering matches the full-sort (torch-style) reference.
    probs = jax.nn.softmax(logits_s, axis=-1)
    topv, topi = _topk_filtered_probs(probs, top_ps, top_ks, TOP_K_BOUND)
    from_topk = jnp.zeros((B, V), jnp.float32).at[
        jnp.arange(B)[:, None], topi].set(topv)

    order = jnp.argsort(-probs, axis=-1)
    ps = jnp.take_along_axis(probs, order, axis=-1)
    csum = jnp.cumsum(ps, axis=-1)
    ps = jnp.where((csum - ps) > top_ps[:, None], 0.0, ps)
    ps = jnp.where(jnp.arange(V)[None, :] >= top_ks[:, None], 0.0, ps)
    ps = ps / ps.sum(axis=-1, keepdims=True)
    ref_probs = jnp.take_along_axis(ps, jnp.argsort(order, axis=-1), axis=-1)

    assert jnp.allclose(from_topk, ref_probs, atol=1e-5, rtol=1e-5)

    # --- Padded-vocab path: V not a multiple of any tile (exercises padding).
    V_odd = 200
    emb_odd = jax.random.normal(k_emb, (V_odd, H), dtype=jnp.float32) * 0.05
    bias_odd = jax.random.normal(k_bias, (V_odd,), dtype=jnp.float32) * 0.01
    ids_odd, logits_odd = sampler_forward(
        emb_odd, hidden_states, output_positions,
        None, top_ps, top_ks,
        embedding_bias=bias_odd,
        final_logit_softcapping=FINAL_LOGIT_SOFTCAP)
    jax.block_until_ready((ids_odd, logits_odd))

    ref_odd = jax.lax.dot_general(
        hs_ref, emb_odd.astype(jnp.bfloat16), (((1,), (1,)), ((), ())),
        preferred_element_type=jnp.float32) + bias_odd[None, :]
    ref_odd = jnp.tanh(ref_odd / FINAL_LOGIT_SOFTCAP) * FINAL_LOGIT_SOFTCAP
    assert logits_odd.shape == (B, V_odd)
    assert jnp.allclose(logits_odd, ref_odd, atol=2e-3, rtol=2e-3)
    assert jnp.array_equal(ids_odd, jnp.argmax(ref_odd, axis=-1))

    print("KERNEL_OK")
</pallas_src>

<mosaic_0001>
module attributes {stable_mosaic.version = 11 : i64} {
  func.func @_logits_kernel(%arg0: i32, %arg1: i32, %arg2: memref<2x128xbf16, #tpu.memory_space<vmem>>, %arg3: memref<128x128xbf16, #tpu.memory_space<vmem>>, %arg4: memref<1x128xf32, #tpu.memory_space<vmem>>, %arg5: memref<2x1xf32, #tpu.memory_space<vmem>>, %arg6: memref<2x128xf32, #tpu.memory_space<vmem>>) attributes {dimension_semantics = [#tpu.dimension_semantics<parallel>, #tpu.dimension_semantics<parallel>], iteration_bounds = array<i64: 2, 1>, scalar_prefetch = 0 : i64, scratch_operands = 0 : i64, tpu.core_type = #tpu.core_type<tc>, window_params = [{transform_indices = @transform_0, window_bounds = array<i64: 2, 128>}, {transform_indices = @transform_1, window_bounds = array<i64: 128, 128>}, {transform_indices = @transform_2, window_bounds = array<i64: 1, 128>}, {transform_indices = @transform_3, window_bounds = array<i64: 2, 1>}, {transform_indices = @transform_4, window_bounds = array<i64: 2, 128>}]} {
    %c0 = arith.constant 0 : index
    %c0_0 = arith.constant 0 : index
    %0 = vector.load %arg2[%c0, %c0_0] : memref<2x128xbf16, #tpu.memory_space<vmem>>, vector<2x128xbf16>
    %c0_1 = arith.constant 0 : index
    %c0_2 = arith.constant 0 : index
    %1 = vector.load %arg3[%c0_1, %c0_2] : memref<128x128xbf16, #tpu.memory_space<vmem>>, vector<128x128xbf16>
    %cst = arith.constant dense<0.000000e+00> : vector<2x128xf32>
    %2 = tpu.matmul %0, %1, %cst {dimension_numbers = #tpu.dot_dimension_numbers<[1], [1], [0], [0], [0, 0, 1, 0], [], []>} : vector<2x128xbf16>, vector<128x128xbf16>, vector<2x128xf32> -> vector<2x128xf32>
    %c0_3 = arith.constant 0 : index
    %c0_4 = arith.constant 0 : index
    %3 = vector.load %arg4[%c0_3, %c0_4] : memref<1x128xf32, #tpu.memory_space<vmem>>, vector<1x128xf32>
    %4 = vector.broadcast %3 : vector<1x128xf32> to vector<2x128xf32>
    %5 = arith.addf %2, %4 : vector<2x128xf32>
    %cst_5 = arith.constant 0.0333333351 : f32
    %6 = vector.broadcast %cst_5 : f32 to vector<2x128xf32>
    %7 = arith.mulf %5, %6 : vector<2x128xf32>
    %8 = math.tanh %7 : vector<2x128xf32>
    %cst_6 = arith.constant 3.000000e+01 : f32
    %9 = vector.broadcast %cst_6 : f32 to vector<2x128xf32>
    %10 = arith.mulf %8, %9 : vector<2x128xf32>
    %c0_7 = arith.constant 0 : index
    %c0_8 = arith.constant 0 : index
    %11 = vector.load %arg5[%c0_7, %c0_8] : memref<2x1xf32, #tpu.memory_space<vmem>>, vector<2x1xf32>
    %12 = tpu.reciprocal %11 : vector<2x1xf32> -> vector<2x1xf32>
    %13 = vector.broadcast %12 : vector<2x1xf32> to vector<2x128xf32>
    %14 = arith.mulf %10, %13 : vector<2x128xf32>
    %c0_9 = arith.constant 0 : index
    %c0_10 = arith.constant 0 : index
    %15 = vector.load %arg6[%c0_9, %c0_10] : memref<2x128xf32, #tpu.memory_space<vmem>>, vector<2x128xf32>
    tpu.vector_store %arg6[%c0_9, %c0_10], %14 {strides = array<i32>} : memref<2x128xf32, #tpu.memory_space<vmem>>, vector<2x128xf32>,
    return
  }
  func.func @transform_0(%arg0: i32, %arg1: i32) -> (i32, i32) {
    %c0_i32 = arith.constant 0 : i32
    %c0_i32_0 = arith.constant 0 : i32
    return %arg1, %c0_i32 : i32, i32
  }
  func.func @transform_1(%arg0: i32, %arg1: i32) -> (i32, i32) {
    %c0_i32 = arith.constant 0 : i32
    %c0_i32_0 = arith.constant 0 : i32
    return %arg0, %c0_i32 : i32, i32
  }
  func.func @transform_2(%arg0: i32, %arg1: i32) -> (i32, i32) {
    %c0_i32 = arith.constant 0 : i32
    %c0_i32_0 = arith.constant 0 : i32
    return %c0_i32, %arg0 : i32, i32
  }
  func.func @transform_3(%arg0: i32, %arg1: i32) -> (i32, i32) {
    %c0_i32 = arith.constant 0 : i32
    %c0_i32_0 = arith.constant 0 : i32
    return %arg1, %c0_i32 : i32, i32
  }
  func.func @transform_4(%arg0: i32, %arg1: i32) -> (i32, i32) {
    %c0_i32 = arith.constant 0 : i32
    return %arg1, %arg0 : i32, i32
  }
}

</mosaic_0001>

<llo_original>
// kernel: tpu_custom_call.1
$region0: #{tpu_custom_call.1}
  #allocation0 [shape = 'u32[]', space=smem, size = 0x4, offset = 0x4, fixed_abs, tag = 'smem constant byte address 0x4 - core index']
  #allocation1 [shape = 'u32[72,128]{1,0:T(1,128)}', space=vmem, size = 0x9000, scoped, tag = 'internal scratch']
  %s0 = inlined_call_operand.vmem [shape: bf16[2,128], index: 0, kind: input, shape index: {}]
  %s1 = inlined_call_operand.hbm [shape: bf16[256,128], index: 1, kind: input, shape index: {}]
  %s2 = inlined_call_operand.vmem [shape: f32[1,256], index: 2, kind: input, shape index: {}]
  %s3 = inlined_call_operand.vmem [shape: f32[2,1], index: 3, kind: input, shape index: {}]
  %s4 = inlined_call_operand.hbm [shape: f32[2,256], index: 4, kind: output, shape index: {}]
  %s5 = sld [smem:[#allocation0]]
  $region53: #{tpu_custom_call.1} parent=0
    _
  %s7 = ssub.s32 1, %s5
  %s8 = scalar_select 0, %s7, %s5
  $region1: #{tpu_custom_call.1} parent=0
    #allocation2 [shape = 'u8[65536]{0}', space=vmem, size = 0x10000, scoped, tag = 'input window, operand 1']
    #allocation3 [shape = 's32[2]{0}', space=sflag, size = 0x8, scoped, tag = 'scoped memory for tpu_custom_call.1']
    #allocation4 [shape = 's32[2]{0}', space=sflag, size = 0x8, scoped, tag = 'scoped memory for tpu_custom_call.1']
    #allocation5 [shape = 'u8[2048]{0}', space=vmem, size = 0x800, scoped, tag = 'output window, operand 0']
    %9 = vsyncpa [#allocation3], 0
    %s10 = scalar_lea.sflag [#allocation3], 1
    %11 = vsyncpa %s10, 0
    %12 = vsyncpa [#allocation4], 0
    %s13 = scalar_lea.sflag [#allocation4], 1
    %14 = vsyncpa %s13, 0
    loop: start=0, step=1, limit=4
    $region2: #{tpu_custom_call.1} parent=1 // loop_pre_header
      _
    $region3: #{tpu_custom_call.1} parent=1 // loop_header
      %s16 = sphi 0, %s20
      %p17 = scmp.ge.s32.totalorder %s16, 4
      %s23 = sphi 0, %s35
      %s24 = sphi 0, %s31
      %s25 = sphi 0, %s23
      %s26 = sphi 0, %s24
      %s27 = sphi 0, %s25
      %s28 = sphi 0, %s26
      %s38 = sphi 0, %s40
      %s41 = sphi 0, %s38
      %s42 = sphi 0, %s41
      %s58 = sphi 0, %s42
      %s64 = sphi 0, %s66
      %s67 = sphi 0, %s64
      %s68 = sphi 0, %s67
      %s84 = sphi 0, %s68
      %s90 = sphi 0, %s92
      %s93 = sphi 0, %s90
      %s94 = sphi 0, %s93
      %s110 = sphi 0, %s94
      %s116 = sphi 0, %s118
      %s119 = sphi 0, %s116
      %s120 = sphi 0, %s119
      %s136 = sphi 0, %s120
      %s144 = sphi 0, %s146
      %s147 = sphi 0, %s144
      %s148 = sphi 0, %s147
      %s164 = sphi 0, %s148
    $region4: #{tpu_custom_call.1} parent=1 // loop_header_branch
      %19 = sbr.rel (%p17) target = $region8
    $region5: #{tpu_custom_call.1} parent=1 // loop_body
      %s21 = ssub.s32 %s16, 1
      %s22 = ssub.s32 %s16, 2
      %s29 = sadd.s32 1, %s24
      %p30 = scmp.ge.s32.totalorder %s29, 1
      %s31 = scalar_select %p30, 0, %s29
      %s32 = sadd.s32 1, %s23
      %s33 = scalar_select %p30, %s32, %s23
      %p34 = scmp.ge.s32.totalorder %s33, 2
      %s35 = scalar_select %p34, 0, %s33
      %s36 = ssub.s32 %s24, %s31
      %p37 = scmp.eq.s32.totalorder %s36, 0
      %s39 = sadd.s32 %s38, 1
      %s40 = scalar_select %p37, %s38, %s39
      %p43 = pneg %p37
      %p44 = scmp.eq.s32.totalorder %s16, 1
      %p45 = por %p43, %p44
      %p46 = scmp.ne.s32.totalorder %s38, %s41
      %p47 = scmp.eq.s32.totalorder %s16, 0
      %p48 = por %p46, %p47
      %p49 = scmp.ne.s32.totalorder %s38, %s41
      %p50 = scmp.eq.s32.totalorder %s21, 1
      %p51 = por %p49, %p50
      %p52 = scmp.ne.s32.totalorder %s41, %s42
      %p53 = scmp.eq.s32.totalorder %s21, 0
      %p54 = por %p52, %p53
      %p55 = scmp.ne.s32.totalorder %s41, %s42
      %p56 = scmp.eq.s32.totalorder %s22, 1
      %p57 = por %p55, %p56
      %p59 = scmp.ne.s32.totalorder %s42, %s58
      %p60 = scmp.eq.s32.totalorder %s22, 0
      %p61 = por %p59, %p60
      %s62 = ssub.s32 %s23, %s35
      %p63 = scmp.eq.s32.totalorder %s62, 0
      %s65 = sadd.s32 %s64, 1
      %s66 = scalar_select %p63, %s64, %s65
      %p69 = pneg %p63
      %p70 = scmp.eq.s32.totalorder %s16, 1
      %p71 = por %p69, %p70
      %p72 = scmp.ne.s32.totalorder %s64, %s67
      %p73 = scmp.eq.s32.totalorder %s16, 0
      %p74 = por %p72, %p73
      %p75 = scmp.ne.s32.totalorder %s64, %s67
      %p76 = scmp.eq.s32.totalorder %s21, 1
      %p77 = por %p75, %p76
      %p78 = scmp.ne.s32.totalorder %s67, %s68
      %p79 = scmp.eq.s32.totalorder %s21, 0
      %p80 = por %p78, %p79
      %p81 = scmp.ne.s32.totalorder %s67, %s68
      %p82 = scmp.eq.s32.totalorder %s22, 1
      %p83 = por %p81, %p82
      %p85 = scmp.ne.s32.totalorder %s68, %s84
      %p86 = scmp.eq.s32.totalorder %s22, 0
      %p87 = por %p85, %p86
      %s88 = ssub.s32 %s23, %s35
      %p89 = scmp.eq.s32.totalorder %s88, 0
      %s91 = sadd.s32 %s90, 1
      %s92 = scalar_select %p89, %s90, %s91
      %p95 = pneg %p89
      %p96 = scmp.eq.s32.totalorder %s16, 1
      %p97 = por %p95, %p96
      %p98 = scmp.ne.s32.totalorder %s90, %s93
      %p99 = scmp.eq.s32.totalorder %s16, 0
      %p100 = por %p98, %p99
      %p101 = scmp.ne.s32.totalorder %s90, %s93
      %p102 = scmp.eq.s32.totalorder %s21, 1
      %p103 = por %p101, %p102
      %p104 = scmp.ne.s32.totalorder %s93, %s94
      %p105 = scmp.eq.s32.totalorder %s21, 0
      %p106 = por %p104, %p105
      %p107 = scmp.ne.s32.totalorder %s93, %s94
      %p108 = scmp.eq.s32.totalorder %s22, 1
      %p109 = por %p107, %p108
      %p111 = scmp.ne.s32.totalorder %s94, %s110
      %p112 = scmp.eq.s32.totalorder %s22, 0
      %p113 = por %p111, %p112
      %s114 = ssub.s32 %s24, %s31
      %p115 = scmp.eq.s32.totalorder %s114, 0
      %s117 = sadd.s32 %s116, 1
      %s118 = scalar_select %p115, %s116, %s117
      %p121 = pneg %p115
      %p122 = scmp.eq.s32.totalorder %s16, 1
      %p123 = por %p121, %p122
      %p124 = scmp.ne.s32.totalorder %s116, %s119
      %p125 = scmp.eq.s32.totalorder %s16, 0
      %p126 = por %p124, %p125
      %p127 = scmp.ne.s32.totalorder %s116, %s119
      %p128 = scmp.eq.s32.totalorder %s21, 1
      %p129 = por %p127, %p128
      %p130 = scmp.ne.s32.totalorder %s119, %s120
      %p131 = scmp.eq.s32.totalorder %s21, 0
      %p132 = por %p130, %p131
      %p133 = scmp.ne.s32.totalorder %s119, %s120
      %p134 = scmp.eq.s32.totalorder %s22, 1
      %p135 = por %p133, %p134
      %p137 = scmp.ne.s32.totalorder %s120, %s136
      %p138 = scmp.eq.s32.totalorder %s22, 0
      %p139 = por %p137, %p138
      %s140 = ssub.s32 %s24, %s31
      %s141 = ssub.s32 %s23, %s35
      %s142 = sor.u32 %s140, %s141
      %p143 = scmp.eq.s32.totalorder %s142, 0
      %s145 = sadd.s32 %s144, 1
      %s146 = scalar_select %p143, %s144, %s145
      %p149 = pneg %p143
      %p150 = scmp.eq.s32.totalorder %s16, 1
      %p151 = por %p149, %p150
      %p152 = scmp.ne.s32.totalorder %s144, %s147
      %p153 = scmp.eq.s32.totalorder %s16, 0
      %p154 = por %p152, %p153
      %p155 = scmp.ne.s32.totalorder %s144, %s147
      %p156 = scmp.eq.s32.totalorder %s21, 1
      %p157 = por %p155, %p156
      %p158 = scmp.ne.s32.totalorder %s147, %s148
      %p159 = scmp.eq.s32.totalorder %s21, 0
      %p160 = por %p158, %p159
      %p161 = scmp.ne.s32.totalorder %s147, %s148
      %p162 = scmp.eq.s32.totalorder %s22, 1
      %p163 = por %p161, %p162
      %p165 = scmp.ne.s32.totalorder %s148, %s164
      %p166 = scmp.eq.s32.totalorder %s22, 0
      %p167 = por %p165, %p166
      %p168 = scmp.le.s32.totalorder 1, %s16
      %p169 = scmp.lt.s32.totalorder %s16, 3
      %p170 = pnand %p168, %p169
      %p171 = pneg %p170
      // Predicated region
      $region9: #{tpu_custom_call.1} parent=5 // pred_check
        _
      $region10: #{tpu_custom_call.1} parent=5 // pred_check_branch
        %173 = sbr.rel (%p170) target = $region12
      $region11: #{tpu_custom_call.1} parent=5 // pred_region
        %s174 = ssub.s32 %s16, 1
        // Predicated region
        $region13: #{tpu_custom_call.1} parent=11 // pred_check
          %p175 = pneg %p54
        $region14: #{tpu_custom_call.1} parent=11 // pred_check_branch
          %177 = sbr.rel (%p175) target = $region16
        $region15: #{tpu_custom_call.1} parent=11 // pred_region
          %p178 = scmp.lt.s32.totalorder %s26, 0
          %s179 = scalar_select %p178, %s26, 0
          %s180 = scalar_lea.vmem %s0, %s179
        $region16: #{tpu_custom_call.1} parent=11 // pred_fallthru
          _
        // Predicated region
        $region17: #{tpu_custom_call.1} parent=11 // pred_check
          %p181 = pneg %p132
        $region18: #{tpu_custom_call.1} parent=11 // pred_check_branch
          %183 = sbr.rel (%p181) target = $region20
        $region19: #{tpu_custom_call.1} parent=11 // pred_region
          %p184 = scmp.lt.s32.totalorder %s26, 0
          %s185 = scalar_select %p184, %s26, 0
          %s186 = smul.addr %s185, 2
          %s187 = scalar_lea.vmem %s3, %s186
        $region20: #{tpu_custom_call.1} parent=11 // pred_fallthru
          _
      $region12: #{tpu_custom_call.1} parent=5 // pred_fallthru
        _
      %p188 = scmp.lt.s32.totalorder %s16, 2
      // Predicated region
      $region21: #{tpu_custom_call.1} parent=5 // pred_check
        %p189 = pneg %p188
      $region22: #{tpu_custom_call.1} parent=5 // pred_check_branch
        %191 = sbr.rel (%p189) target = $region24
      $region23: #{tpu_custom_call.1} parent=5 // pred_region
        // Predicated region
        $region25: #{tpu_custom_call.1} parent=23 // pred_check
          %p192 = pneg %p74
        $region26: #{tpu_custom_call.1} parent=23 // pred_check_branch
          %194 = sbr.rel (%p192) target = $region28
        $region27: #{tpu_custom_call.1} parent=23 // pred_region
          %s195 = sand.u32 %s64, 1
          %s196 = scalar_lea.sflag [#allocation3], %s195
          %s197 = sand.u32 %s64, 1
          %s198 = smul.addr %s197, 64
          %s199 = scalar_lea.vmem [#allocation2], %s198
          %s200 = smul.u32 16, %s23
          %202 = vsyncadd %s196, 0
          %s203 = smul.addr %s200, 4
          %s204 = scalar_lea.hbm %s1, %s203
          %s205 = sshll.u32 %s204, 4
          %s206 = int_to_ptr.hbm [resolvable:$true] %s205
          %s207 = sshll.u32 %s199, 4
          %s208 = int_to_ptr.vmem [resolvable:$true] %s207
          %213 = dma.hbm_to_vmem [thread:$0]  %s206, 1024, %s208, %s196, 64, 64, 4
        $region28: #{tpu_custom_call.1} parent=23 // pred_fallthru
          _
        // Predicated region
        $region29: #{tpu_custom_call.1} parent=23 // pred_check
          %p214 = pneg %p100
        $region30: #{tpu_custom_call.1} parent=23 // pred_check_branch
          %216 = sbr.rel (%p214) target = $region32
        $region31: #{tpu_custom_call.1} parent=23 // pred_region
          %p217 = scmp.lt.s32.totalorder %s23, 1
          %s218 = scalar_select %p217, %s23, 1
          %s219 = scalar_lea.vmem %s2, %s218
        $region32: #{tpu_custom_call.1} parent=23 // pred_fallthru
          _
      $region24: #{tpu_custom_call.1} parent=5 // pred_fallthru
        _
      %p220 = scmp.le.s32.totalorder 1, %s16
      %p221 = scmp.lt.s32.totalorder %s16, 3
      %p222 = pnand %p220, %p221
      %p223 = pneg %p222
      // Predicated region
      $region33: #{tpu_custom_call.1} parent=5 // pred_check
        _
      $region34: #{tpu_custom_call.1} parent=5 // pred_check_branch
        %225 = sbr.rel (%p222) target = $region36
      $region35: #{tpu_custom_call.1} parent=5 // pred_region
        %s226 = ssub.s32 %s16, 1
        %s227 = sand.u32 %s67, 1
        %s228 = scalar_lea.sflag [#allocation3], %s227
        %s229 = sand.u32 %s67, 1
        %s230 = smul.addr %s229, 64
        %s231 = scalar_lea.vmem [#allocation2], %s230
        // Predicated region
        $region37: #{tpu_custom_call.1} parent=35 // pred_check
          %p232 = pneg %p80
        $region38: #{tpu_custom_call.1} parent=35 // pred_check_branch
          %234 = sbr.rel (%p232) target = $region40
        $region39: #{tpu_custom_call.1} parent=35 // pred_region
          %236 = dma.done %s228, 1024
        $region40: #{tpu_custom_call.1} parent=35 // pred_fallthru
          _
        %p237 = scmp.lt.s32.totalorder %s26, 0
        %s238 = scalar_select %p237, %s26, 0
        %s239 = scalar_lea.vmem %s0, %s238
        %p240 = pneg %p54
        %p241 = pneg %p51
        %s242 = sand.u32 %s67, 1
        %s243 = scalar_lea.sflag [#allocation3], %s242
        %s244 = sand.u32 %s67, 1
        %s245 = smul.addr %s244, 64
        %s246 = scalar_lea.vmem [#allocation2], %s245
        %p247 = pneg %p80
        %p248 = pneg %p77
        %p249 = scmp.lt.s32.totalorder %s25, 1
        %s250 = scalar_select %p249, %s25, 1
        %s251 = scalar_lea.vmem %s2, %s250
        %p252 = pneg %p106
        %p253 = pneg %p103
        %p254 = scmp.lt.s32.totalorder %s26, 0
        %s255 = scalar_select %p254, %s26, 0
        %s256 = smul.addr %s255, 2
        %s257 = scalar_lea.vmem %s3, %s256
        %p258 = pneg %p132
        %p259 = pneg %p129
        %p260 = pneg %p160
        %p261 = pneg %p157
        %s262 = sand.u32 %s147, 1
        %s263 = scalar_lea.sflag [#allocation4], %s262
        %s264 = sand.u32 %s147, 1
        %s265 = smul.addr %s264, 2
        %s266 = scalar_lea.vmem [#allocation5], %s265
        %p267 = scmp.lt.s32.totalorder %s26, 0
        %s268 = scalar_select %p267, %s26, 0
        %s269 = scalar_lea.vmem %s0, %s268
        %s270 = smul.u32 16, %s25
        %p271 = scmp.lt.s32.totalorder %s25, 1
        %s272 = scalar_select %p271, %s25, 1
        %s273 = scalar_lea.vmem %s2, %s272
        %p274 = scmp.lt.s32.totalorder %s26, 0
        %s275 = scalar_select %p274, %s26, 0
        %s276 = smul.addr %s275, 2
        %s277 = scalar_lea.vmem %s3, %s276
        %v278 = vld [vmem:[%s269] sm:$0x1]
        %v279 = vld [vmem:[%s231] sm:$0xf]
        %v280 = vld [vmem:[%s231 + $0x4] sm:$0xf]
        %v281 = vld [vmem:[%s231 + $0x8] sm:$0xf]
        %v282 = vld [vmem:[%s231 + $0xc] sm:$0xf]
        %v283 = vld [vmem:[%s231 + $0x10] sm:$0xf]
        %v284 = vld [vmem:[%s231 + $0x14] sm:$0xf]
        %v285 = vld [vmem:[%s231 + $0x18] sm:$0xf]
        %v286 = vld [vmem:[%s231 + $0x1c] sm:$0xf]
        %v287 = vld [vmem:[%s231 + $0x20] sm:$0xf]
        %v288 = vld [vmem:[%s231 + $0x24] sm:$0xf]
        %v289 = vld [vmem:[%s231 + $0x28] sm:$0xf]
        %v290 = vld [vmem:[%s231 + $0x2c] sm:$0xf]
        %v291 = vld [vmem:[%s231 + $0x30] sm:$0xf]
        %v292 = vld [vmem:[%s231 + $0x34] sm:$0xf]
        %v293 = vld [vmem:[%s231 + $0x38] sm:$0xf]
        %v294 = vld [vmem:[%s231 + $0x3c] sm:$0xf]
        %v295 = vld [vmem:[%s273] sm:$0x1]
        %v297 = vperm.slane %v295, 0
        %v315 = vunpack.c.l.b16 %v279
        %v316 = vunpack.c.l.b16 %v280
        %v317 = vunpack.c.l.b16 %v281
        %v318 = vunpack.c.l.b16 %v282
        %v319 = vunpack.c.l.b16 %v283
        %v320 = vunpack.c.l.b16 %v284
        %v321 = vunpack.c.l.b16 %v285
        %v322 = vunpack.c.l.b16 %v286
        %v323 = vunpack.c.l.b16 %v287
        %v324 = vunpack.c.l.b16 %v288
        %v325 = vunpack.c.l.b16 %v289
        %v326 = vunpack.c.l.b16 %v290
        %v327 = vunpack.c.l.b16 %v291
        %v328 = vunpack.c.l.b16 %v292
        %v329 = vunpack.c.l.b16 %v293
        %v330 = vunpack.c.l.b16 %v294
        %v331 = vpack.c.b16 %v316, %v315
        %v332 = vpack.c.b16 %v318, %v317
        %v333 = vpack.c.b16 %v320, %v319
        %v334 = vpack.c.b16 %v322, %v321
        %v335 = vpack.c.b16 %v324, %v323
        %v336 = vpack.c.b16 %v326, %v325
        %v337 = vpack.c.b16 %v328, %v327
        %v338 = vpack.c.b16 %v330, %v329
        %347 = vmatpush.bf16.xpose.msra.mxu0 %v338
        %348 = vmatpush.bf16.xpose.msra.mxu0 %v337
        %349 = vmatpush.bf16.xpose.msra.mxu0 %v336
        %350 = vmatpush.bf16.xpose.msra.mxu0 %v335
        %351 = vmatpush.bf16.xpose.msra.mxu0 %v334
        %352 = vmatpush.bf16.xpose.msra.mxu0 %v333
        %353 = vmatpush.bf16.xpose.msra.mxu0 %v332
        %354 = vmatpush.bf16.xpose.msra.mxu0 %v331
        %355 = vmatmul.bf16.gmra.mxu0 %v278
        %v356 = vpop.f32.mrf.mxu0
        %v357 = vadd.f32 %v297, %v356
        %v358 = vpop.f32.mrf.mxu0
        %359 = vdwg.mxu0
        %v360 = vmul.f32 %v357, 0.033333335
        %v361 = vtanh.pop %v360
        %v362 = vmul.f32 %v361, 30.0
        %v363 = vld [vmem:[%s277] sm:$0x3]
        %v364 = vrcp.pop %v363
        %v365 = vmul.f32 %v363, %v364
        %v366 = vsub.f32 1.0, %v365
        %v367 = vmul.f32 %v364, %v366
        %v368 = vadd.f32 %v364, %v367
        %vm369 = vweird.f32 %v363
        %vm370 = vweird.f32 %v364
        %vm371 = vmor %vm369, %vm370
        %v372 = vsel %vm371, %v364, %v368
        %v373 = vand.u32 2147483647, %v363
        %vm374 = vcmp.eq.f32.partialorder %v373, 8.507059e+37
        %v375 = vand.u32 %v363, 2147483648
        %v376 = vor.u32 1.1754944e-38, %v375
        %v377 = vsel %vm374, %v376, %v372
        %379 = vset.pattern.permute.xlu0 0
        %380 = vperm.xlu0 %379, %v377
        %v381 = vpop.permute.xlu0 %380
        %v383 = vmul.f32 %v362, %v381
        %384 = vst [vmem:[%s266] sm:$0x3] %v383
        %s385 = sand.u32 %s147, 1
        %s386 = scalar_lea.sflag [#allocation4], %s385
        %s387 = sand.u32 %s147, 1
        %s388 = smul.addr %s387, 2
        %s389 = scalar_lea.vmem [#allocation5], %s388
        // Predicated region
        $region41: #{tpu_custom_call.1} parent=35 // pred_check
          %p390 = pneg %p157
        $region42: #{tpu_custom_call.1} parent=35 // pred_check_branch
          %392 = sbr.rel (%p390) target = $region44
        $region43: #{tpu_custom_call.1} parent=35 // pred_region
          %394 = vsyncadd %s386, 0
          %s395 = smul.addr %s26, 2
          %s396 = sadd.s32 %s25, %s395
          %s397 = smul.addr %s396, 2
          %s398 = scalar_lea.hbm %s4, %s397
          %s400 = sshll.u32 %s389, 4
          %s401 = int_to_ptr.vmem [resolvable:$true] %s400
          %s402 = sshll.u32 %s398, 4
          %s403 = int_to_ptr.hbm [resolvable:$true] %s402
          %405 = dma.vmem_to_hbm [thread:$0]  %s401, 32, %s403, %s386
        $region44: #{tpu_custom_call.1} parent=35 // pred_fallthru
          _
      $region36: #{tpu_custom_call.1} parent=5 // pred_fallthru
        _
      %p406 = scmp.le.s32.totalorder 2, %s16
      // Predicated region
      $region45: #{tpu_custom_call.1} parent=5 // pred_check
        %p407 = pneg %p406
      $region46: #{tpu_custom_call.1} parent=5 // pred_check_branch
        %409 = sbr.rel (%p407) target = $region48
      $region47: #{tpu_custom_call.1} parent=5 // pred_region
        %s410 = ssub.s32 %s16, 2
        // Predicated region
        $region49: #{tpu_custom_call.1} parent=47 // pred_check
          %p411 = pneg %p163
        $region50: #{tpu_custom_call.1} parent=47 // pred_check_branch
          %413 = sbr.rel (%p411) target = $region52
        $region51: #{tpu_custom_call.1} parent=47 // pred_region
          %s414 = sand.u32 %s148, 1
          %s415 = scalar_lea.sflag [#allocation4], %s414
          %s416 = sand.u32 %s148, 1
          %s417 = smul.addr %s416, 2
          %s418 = scalar_lea.vmem [#allocation5], %s417
          %420 = dma.done %s415, 32
        $region52: #{tpu_custom_call.1} parent=47 // pred_fallthru
          _
      $region48: #{tpu_custom_call.1} parent=5 // pred_fallthru
        _
    $region6: #{tpu_custom_call.1} parent=1 // loop_footer
      %s20 = sadd.s32 1, %s16
    $region7: #{tpu_custom_call.1} parent=1 // loop_footer_branch
      %15 = sbr.rel target = $region3
    $region8: #{tpu_custom_call.1} parent=1 // loop_exit
      _
    %421 = vsyncpa [#allocation3], 1
    %s422 = scalar_lea.sflag [#allocation3], 1
    %423 = vsyncpa %s422, 1
    %424 = vsyncpa [#allocation4], 1
    %s425 = scalar_lea.sflag [#allocation4], 1
    %426 = vsyncpa %s425, 1

</llo_original>
